<compile_context>
chip_gen: v5e
topology: v5e:2x2
jax: 0.10.0
libtpu: 0.0.40
codegen_flags: <defaults>
</compile_context>

<pallas_src>
import numpy as np
import jax
import jax.numpy as jnp
from jax import lax
from jax.experimental import pallas as pl
from jax.experimental.pallas import tpu as pltpu


# ----------------------------------------------------------------------------
# Deterministic kernel construction (verbatim port of get_kernel, numpy only).
# ----------------------------------------------------------------------------
def get_kernel(factor, kernel_type, phase, kernel_width, support=None, sigma=None):
    assert kernel_type in ['lanczos', 'gauss', 'box']
    if phase == 0.5 and kernel_type != 'box':
        kernel = np.zeros([kernel_width - 1, kernel_width - 1])
    else:
        kernel = np.zeros([kernel_width, kernel_width])
    if kernel_type == 'box':
        assert phase == 0.5, 'Box filter is always half-phased'
        kernel[:] = 1.0 / (kernel_width * kernel_width)
    elif kernel_type == 'gauss':
        assert sigma, 'sigma is not specified'
        assert phase != 0.5, 'phase 1/2 for gauss not implemented'
        center = (kernel_width + 1.0) / 2.0
        sigma_sq = sigma * sigma
        for i in range(1, kernel.shape[0] + 1):
            for j in range(1, kernel.shape[1] + 1):
                di = (i - center) / 2.0
                dj = (j - center) / 2.0
                kernel[i - 1][j - 1] = np.exp(-(di * di + dj * dj) / (2 * sigma_sq))
                kernel[i - 1][j - 1] = kernel[i - 1][j - 1] / (2.0 * np.pi * sigma_sq)
    elif kernel_type == 'lanczos':
        assert support, 'support is not specified'
        center = (kernel_width + 1) / 2.0
        for i in range(1, kernel.shape[0] + 1):
            for j in range(1, kernel.shape[1] + 1):
                if phase == 0.5:
                    di = abs(i + 0.5 - center) / factor
                    dj = abs(j + 0.5 - center) / factor
                else:
                    di = abs(i - center) / factor
                    dj = abs(j - center) / factor
                val = 1
                if di != 0:
                    val = val * support * np.sin(np.pi * di) * np.sin(np.pi * di / support)
                    val = val / (np.pi * np.pi * di * di)
                if dj != 0:
                    val = val * support * np.sin(np.pi * dj) * np.sin(np.pi * dj / support)
                    val = val / (np.pi * np.pi * dj * dj)
                kernel[i - 1][j - 1] = val
    else:
        assert False, 'wrong method name'
    kernel /= kernel.sum()
    return kernel


def resolve_kernel(n_planes, factor, kernel_type, phase=0,
                   kernel_width=None, support=None, sigma=None):
    if kernel_type == 'lanczos2':
        support = 2
        kernel_width = 4 * factor + 1
        kernel_type_ = 'lanczos'
    elif kernel_type == 'lanczos3':
        support = 3
        kernel_width = 6 * factor + 1
        kernel_type_ = 'lanczos'
    elif kernel_type == 'gauss12':
        kernel_width = 7
        sigma = 1 / 2
        kernel_type_ = 'gauss'
    elif kernel_type == 'gauss1sq2':
        kernel_width = 9
        sigma = 1.0 / np.sqrt(2)
        kernel_type_ = 'gauss'
    elif kernel_type in ['lanczos', 'gauss', 'box']:
        kernel_type_ = kernel_type
    else:
        assert False, 'wrong name kernel'
    return get_kernel(factor, kernel_type_, phase, kernel_width,
                      support=support, sigma=sigma)


def _separable_taps(kernel_np):
    """Exact rank-1 factorization kernel = outer(u, v) (box/gauss/lanczos are
    all separable); raises if a non-separable kernel is ever supplied."""
    k = np.asarray(kernel_np, dtype=np.float64)
    r, c = np.unravel_index(int(np.argmax(np.abs(k))), k.shape)
    u = k[:, c].copy()
    v = k[r, :] / k[r, c]
    err = float(np.max(np.abs(np.outer(u, v) - k)))
    if err > 1e-9 * max(1.0, float(np.max(np.abs(k)))):
        raise ValueError(
            "downsampling kernel is not separable (max residual %g); "
            "separable fast path is invalid" % err)
    return u, v


def _build_operators(u_taps, v_taps, factor, H, W, Hout, Wout, Wq):
    """Dense banded operators so that  out = R @ x @ C  (stride folded in).
    C has Wq >= Wout columns; padded columns are zero (sliced off later)."""
    K = len(u_taps)
    row_op = np.zeros((Hout, H), np.float64)
    for o in range(Hout):
        row_op[o, o * factor:o * factor + K] = u_taps
    col_op = np.zeros((W, Wq), np.float64)
    for q in range(Wout):
        col_op[q * factor:q * factor + K, q] = v_taps
    return row_op, col_op


# ----------------------------------------------------------------------------
# Pallas kernel
# ----------------------------------------------------------------------------
def _make_downsample_kernel(B, H, W, Hout, Wq, compute_dtype):
    def kern(x_ref, rop_ref, cop_ref, o_ref):
        # Operators are grid-invariant inputs (constant index_map -> fetched
        # once); no per-step iota/where construction.
        x = x_ref[...].astype(compute_dtype)          # (B, H, W)
        cop = cop_ref[...]                            # (W, Wq)   compute dtype
        rop = rop_ref[...]                            # (Hout, H) compute dtype

        # Column pass: one big matmul, M = B*H fills the MXU.
        xf = x.reshape(B * H, W)
        t = jnp.dot(xf, cop, preferred_element_type=jnp.float32)   # (B*H, Wq)
        t = t.astype(compute_dtype).reshape(B, H, Wq)

        # Row pass: batched over the B planes (shared operator broadcast once).
        rop_b = jnp.broadcast_to(rop[None, :, :], (B, Hout, H))
        y = lax.dot_general(rop_b, t,
                            dimension_numbers=(((2,), (1,)), ((0,), (0,))),
                            preferred_element_type=jnp.float32)    # (B,Hout,Wq)

        # Conv2d bias is initialized to 0 -> nothing to add.
        o_ref[...] = y.astype(o_ref.dtype)

    return kern


def _vmem_budget():
    cap = 128 * 1024 * 1024
    try:
        info = pltpu.get_tpu_info()
        cap = int(getattr(info, "vmem_capacity_bytes", cap))
    except Exception:
        cap = 64 * 1024 * 1024          # conservative (v7x per-TC) fallback
    limit = min(cap // 2, 64 * 1024 * 1024)
    return limit, int(limit * 0.75)


def _choose_block_planes(P, per_plane_bytes, fixed_bytes, budget_bytes):
    """B = planes per grid step.  Largest divisor of P that fits the budget,
    but prefer 4-8 pipelined grid steps (hides the block DMA on 1-TC chips and
    still splits evenly across v7x's two TensorCores)."""
    divisors = [d for d in range(1, P + 1) if P % d == 0]
    fitting = [d for d in divisors
               if fixed_bytes + d * per_plane_bytes <= budget_bytes]
    if not fitting:
        # TODO(synk): add a W-tiling grid axis so a single huge plane (plus
        # f32 intermediates) can still fit VMEM; fall back to B=1 for now.
        return 1
    b = max(fitting)
    steps = P // b
    if steps < 4:
        alt = [d for d in fitting if 4 <= P // d <= 8]
        if alt:
            b = max(alt)
        elif steps == 1 and P % 2 == 0 and (P // 2) in fitting:
            b = P // 2
    return int(b)


def downsampler_forward(x, kernel_np, factor, preserve_size=False):
    """x: (N, C, H, W).  Matches Downsampler.forward: fixed depthwise conv
    (weight[i, i] = kernel, bias = 0), stride = factor, VALID padding."""
    if preserve_size:
        # nn.ReplicationPad2d equivalent (not the hot path here).
        # TODO(synk): fold the replication pad into the operators via clamped
        # index arithmetic to avoid the extra HBM round-trip when hot.
        K0 = kernel_np.shape[0]
        p = (K0 - 1) // 2 if K0 % 2 == 1 else (K0 - factor) // 2
        x = jnp.pad(x, ((0, 0), (0, 0), (p, p), (p, p)), mode='edge')

    N, C, H, W = x.shape
    K = kernel_np.shape[0]
    Hout = (H - K) // factor + 1
    Wout = (W - K) // factor + 1

    # Lane-dense output: pad the output width to a multiple of 128 when the
    # overhead is modest (avoids masked vst.msk partial stores); otherwise keep
    # the exact width (tiny demo shapes).
    pad128 = ((Wout + 127) // 128) * 128
    Wq = pad128 if pad128 <= max(int(1.5 * Wout), Wout) and pad128 != Wout * 0 and pad128 <= 2 * Wout else Wout
    if Wout % 128 == 0:
        Wq = Wout

    u_taps, v_taps = _separable_taps(kernel_np)
    row_np, col_np = _build_operators(u_taps, v_taps, factor, H, W, Hout, Wout, Wq)

    # Keep both MXU operands in the fast (input) dtype; accumulate in f32.
    compute_dtype = x.dtype if jnp.issubdtype(x.dtype, jnp.floating) else jnp.float32
    rop = jnp.asarray(row_np, dtype=compute_dtype)         # (Hout, H)
    cop = jnp.asarray(col_np, dtype=compute_dtype)         # (W, Wq)

    P = N * C
    in_bytes = jnp.dtype(x.dtype).itemsize
    cp_bytes = jnp.dtype(compute_dtype).itemsize
    vmem_limit, budget = _vmem_budget()

    # Real per-step footprint: in/out double buffers + f32 intermediate +
    # compute-dtype cast copy + f32 result + broadcast row operator.
    fixed = 2 * (Hout * H + W * Wq) * cp_bytes
    per_plane = (2 * H * W * in_bytes
                 + 2 * Hout * Wq * in_bytes
                 + H * Wq * 4
                 + H * Wq * cp_bytes
                 + Hout * Wq * 4
                 + Hout * H * cp_bytes)
    B = _choose_block_planes(P, per_plane, fixed, budget)

    kern = _make_downsample_kernel(B, H, W, Hout, Wq, compute_dtype)

    flops = 2 * P * Wq * (H * W + Hout * H)
    bytes_accessed = (P * (H * W + Hout * Wq) * in_bytes
                      + (Hout * H + W * Wq) * cp_bytes)

    xr = x.reshape(P, H, W)
    out = pl.pallas_call(
        kern,
        out_shape=jax.ShapeDtypeStruct((P, Hout, Wq), x.dtype),
        grid=(P // B,),
        in_specs=[
            pl.BlockSpec((B, H, W), lambda i: (i, 0, 0)),
            pl.BlockSpec((Hout, H), lambda i: (0, 0)),   # fetched once
            pl.BlockSpec((W, Wq), lambda i: (0, 0)),     # fetched once
        ],
        out_specs=pl.BlockSpec((B, Hout, Wq), lambda i: (i, 0, 0)),
        compiler_params=pltpu.CompilerParams(
            dimension_semantics=("parallel",),
            vmem_limit_bytes=int(vmem_limit)),
        cost_estimate=pl.CostEstimate(flops=int(flops), transcendentals=0,
                                      bytes_accessed=int(bytes_accessed)),
    )(xr, rop, cop)

    if Wq != Wout:
        out = out[:, :, :Wout]
    return out.reshape(N, C, Hout, Wout)

    # TODO(synk): on v5e for very large planes the dense banded-operator
    # formulation inflates MXU MACs by ~H/K; a banded/strided-slice VPU FMA
    # path would be preferable there.


# ----------------------------------------------------------------------------
# Pure-JAX reference (mirrors the PyTorch Conv2d forward) for verification.
# ----------------------------------------------------------------------------
def downsampler_reference(x, kernel_np, factor):
    N, C, H, W = x.shape
    k = jnp.asarray(kernel_np.astype(np.float32))
    rhs = jnp.tile(k[None, None], (C, 1, 1, 1))          # (C, 1, K, K) depthwise
    return lax.conv_general_dilated(
        x, rhs, window_strides=(factor, factor), padding='VALID',
        dimension_numbers=('NCHW', 'OIHW', 'NCHW'),
        feature_group_count=C)


if __name__ == "__main__":
    # Module config: Downsampler(n_planes=4, factor=2, kernel_type='lanczos2', phase=0)
    n_planes, factor = 4, 2
    kernel_np = resolve_kernel(n_planes, factor, 'lanczos2', phase=0)   # (9, 9)

    key = jax.random.PRNGKey(0)
    x = jax.random.normal(key, (2, n_planes, 16, 16), dtype=jnp.float32)

    out = jax.block_until_ready(downsampler_forward(x, kernel_np, factor,
                                                    preserve_size=False))
    ref = jax.block_until_ready(downsampler_reference(x, kernel_np, factor))

    assert out.shape == ref.shape == (2, n_planes, 4, 4), (out.shape, ref.shape)
    np.testing.assert_allclose(np.asarray(out), np.asarray(ref), rtol=1e-4, atol=1e-5)

    print("KERNEL_OK")
</pallas_src>

<mosaic_0001>
module attributes {stable_mosaic.version = 11 : i64} {
  func.func @kern(%arg0: i32, %arg1: memref<2x16x16xf32, #tpu.memory_space<vmem>>, %arg2: memref<4x16xf32, #tpu.memory_space<vmem>>, %arg3: memref<16x4xf32, #tpu.memory_space<vmem>>, %arg4: memref<2x4x4xf32, #tpu.memory_space<vmem>>) attributes {dimension_semantics = [#tpu.dimension_semantics<parallel>], iteration_bounds = array<i64: 4>, scalar_prefetch = 0 : i64, scratch_operands = 0 : i64, tpu.core_type = #tpu.core_type<tc>, window_params = [{transform_indices = @transform_0, window_bounds = array<i64: 2, 16, 16>}, {pipeline_mode = #tpu.pipeline_mode<synchronous>, transform_indices = @transform_1, window_bounds = array<i64: 4, 16>}, {pipeline_mode = #tpu.pipeline_mode<synchronous>, transform_indices = @transform_2, window_bounds = array<i64: 16, 4>}, {transform_indices = @transform_3, window_bounds = array<i64: 2, 4, 4>}]} {
    %c0 = arith.constant 0 : index
    %c0_0 = arith.constant 0 : index
    %c0_1 = arith.constant 0 : index
    %0 = vector.load %arg1[%c0, %c0_0, %c0_1] : memref<2x16x16xf32, #tpu.memory_space<vmem>>, vector<2x16x16xf32>
    %c0_2 = arith.constant 0 : index
    %c0_3 = arith.constant 0 : index
    %1 = vector.load %arg3[%c0_2, %c0_3] : memref<16x4xf32, #tpu.memory_space<vmem>>, vector<16x4xf32>
    %c0_4 = arith.constant 0 : index
    %c0_5 = arith.constant 0 : index
    %2 = vector.load %arg2[%c0_4, %c0_5] : memref<4x16xf32, #tpu.memory_space<vmem>>, vector<4x16xf32>
    %3 = vector.shape_cast %0 : vector<2x16x16xf32> to vector<32x16xf32>
    %cst = arith.constant dense<0.000000e+00> : vector<32x4xf32>
    %4 = tpu.matmul %3, %1, %cst {dimension_numbers = #tpu.dot_dimension_numbers<[1], [0], [0], [1], [0, 0, 1, 1], [], []>} : vector<32x16xf32>, vector<16x4xf32>, vector<32x4xf32> -> vector<32x4xf32>
    %5 = vector.shape_cast %4 : vector<32x4xf32> to vector<2x16x4xf32>
    %6 = vector.shape_cast %2 : vector<4x16xf32> to vector<1x4x16xf32>
    %7 = vector.shape_cast %6 : vector<1x4x16xf32> to vector<1x4x16xf32>
    %8 = vector.broadcast %7 : vector<1x4x16xf32> to vector<2x4x16xf32>
    %cst_6 = arith.constant dense<0.000000e+00> : vector<2x4x4xf32>
    %9 = tpu.matmul %8, %5, %cst_6 {dimension_numbers = #tpu.dot_dimension_numbers<[2], [1], [1], [2], [0, 0, 0, 1, 1, 2], [0], [0]>} : vector<2x4x16xf32>, vector<2x16x4xf32>, vector<2x4x4xf32> -> vector<2x4x4xf32>
    %c0_7 = arith.constant 0 : index
    %c0_8 = arith.constant 0 : index
    %c0_9 = arith.constant 0 : index
    %10 = vector.load %arg4[%c0_7, %c0_8, %c0_9] : memref<2x4x4xf32, #tpu.memory_space<vmem>>, vector<2x4x4xf32>
    tpu.vector_store %arg4[%c0_7, %c0_8, %c0_9], %9 {strides = array<i32>} : memref<2x4x4xf32, #tpu.memory_space<vmem>>, vector<2x4x4xf32>,
    return
  }
  func.func @transform_0(%arg0: i32) -> (i32, i32, i32) {
    %c0_i32 = arith.constant 0 : i32
    %c0_i32_0 = arith.constant 0 : i32
    %c0_i32_1 = arith.constant 0 : i32
    return %arg0, %c0_i32, %c0_i32_0 : i32, i32, i32
  }
  func.func @transform_1(%arg0: i32) -> (i32, i32) {
    %c0_i32 = arith.constant 0 : i32
    %c0_i32_0 = arith.constant 0 : i32
    %c0_i32_1 = arith.constant 0 : i32
    return %c0_i32, %c0_i32_0 : i32, i32
  }
  func.func @transform_2(%arg0: i32) -> (i32, i32) {
    %c0_i32 = arith.constant 0 : i32
    %c0_i32_0 = arith.constant 0 : i32
    %c0_i32_1 = arith.constant 0 : i32
    return %c0_i32, %c0_i32_0 : i32, i32
  }
  func.func @transform_3(%arg0: i32) -> (i32, i32, i32) {
    %c0_i32 = arith.constant 0 : i32
    %c0_i32_0 = arith.constant 0 : i32
    %c0_i32_1 = arith.constant 0 : i32
    return %arg0, %c0_i32, %c0_i32_0 : i32, i32, i32
  }
}

</mosaic_0001>

<llo_original>
// kernel: tpu_custom_call.1
$region0: #{tpu_custom_call.1}
  #allocation0 [shape = 'u32[]', space=smem, size = 0x4, offset = 0x4, fixed_abs, tag = 'smem constant byte address 0x4 - core index']
  #allocation1 [shape = 'u32[72,128]{1,0:T(1,128)}', space=vmem, size = 0x9000, scoped, tag = 'internal scratch']
  %s0 = inlined_call_operand.hbm [shape: f32[8,16,16], index: 0, kind: input, shape index: {}]
  %s1 = inlined_call_operand.vmem [shape: f32[4,16], index: 1, kind: input, shape index: {}]
  %s2 = inlined_call_operand.vmem [shape: f32[16,4], index: 2, kind: input, shape index: {}]
  %s3 = inlined_call_operand.vmem [shape: f32[8,4,4], index: 3, kind: output, shape index: {}]
  %s4 = sld [smem:[#allocation0]]
  $region49: #{tpu_custom_call.1} parent=0
    _
  %s6 = ssub.s32 1, %s4
  %s7 = scalar_select 0, %s6, %s4
  $region1: #{tpu_custom_call.1} parent=0
    #allocation2 [shape = 'u8[32768]{0}', space=vmem, size = 0x8000, scoped, tag = 'input window, operand 0']
    #allocation3 [shape = 's32[2]{0}', space=sflag, size = 0x8, scoped, tag = 'scoped memory for tpu_custom_call.1']
    %8 = vsyncpa [#allocation3], 0
    %s9 = scalar_lea.sflag [#allocation3], 1
    %10 = vsyncpa %s9, 0
    loop: start=0, step=1, limit=6
    $region2: #{tpu_custom_call.1} parent=1 // loop_pre_header
      _
    $region3: #{tpu_custom_call.1} parent=1 // loop_header
      %s12 = sphi 0, %s16
      %p13 = scmp.ge.s32.totalorder %s12, 6
      %s22 = sphi 0, %s24
      %s25 = sphi 0, %s22
      %s26 = sphi 0, %s25
      %s42 = sphi 0, %s26
      %s46 = sphi 0, %s46
      %s48 = sphi 0, %s46
      %s49 = sphi 0, %s48
      %s63 = sphi 0, %s49
      %s67 = sphi 0, %s67
      %s69 = sphi 0, %s67
      %s70 = sphi 0, %s69
      %s84 = sphi 0, %s70
      %s90 = sphi 0, %s92
      %s93 = sphi 0, %s90
      %s94 = sphi 0, %s93
      %s110 = sphi 0, %s94
    $region4: #{tpu_custom_call.1} parent=1 // loop_header_branch
      %15 = sbr.rel (%p13) target = $region8
    $region5: #{tpu_custom_call.1} parent=1 // loop_body
      %s17 = ssub.s32 %s12, 1
      %s18 = ssub.s32 %s12, 2
      %s19 = sadd.s32 %s12, 1
      %s20 = ssub.s32 %s12, %s19
      %p21 = scmp.eq.s32.totalorder %s20, 0
      %s23 = sadd.s32 %s22, 1
      %s24 = scalar_select %p21, %s22, %s23
      %p27 = pneg %p21
      %p28 = scmp.eq.s32.totalorder %s12, 3
      %p29 = por %p27, %p28
      %p30 = scmp.ne.s32.totalorder %s22, %s25
      %p31 = scmp.eq.s32.totalorder %s12, 0
      %p32 = por %p30, %p31
      %p33 = scmp.ne.s32.totalorder %s22, %s25
      %p34 = scmp.eq.s32.totalorder %s17, 3
      %p35 = por %p33, %p34
      %p36 = scmp.ne.s32.totalorder %s25, %s26
      %p37 = scmp.eq.s32.totalorder %s17, 0
      %p38 = por %p36, %p37
      %p39 = scmp.ne.s32.totalorder %s25, %s26
      %p40 = scmp.eq.s32.totalorder %s18, 3
      %p41 = por %p39, %p40
      %p43 = scmp.ne.s32.totalorder %s26, %s42
      %p44 = scmp.eq.s32.totalorder %s18, 0
      %p45 = por %p43, %p44
      %s47 = sadd.s32 %s46, 1
      %p50 = scmp.eq.s32.totalorder %s12, 3
      %p51 = scmp.ne.s32.totalorder %s46, %s48
      %p52 = scmp.eq.s32.totalorder %s12, 0
      %p53 = por %p51, %p52
      %p54 = scmp.ne.s32.totalorder %s46, %s48
      %p55 = scmp.eq.s32.totalorder %s17, 3
      %p56 = por %p54, %p55
      %p57 = scmp.ne.s32.totalorder %s48, %s49
      %p58 = scmp.eq.s32.totalorder %s17, 0
      %p59 = por %p57, %p58
      %p60 = scmp.ne.s32.totalorder %s48, %s49
      %p61 = scmp.eq.s32.totalorder %s18, 3
      %p62 = por %p60, %p61
      %p64 = scmp.ne.s32.totalorder %s49, %s63
      %p65 = scmp.eq.s32.totalorder %s18, 0
      %p66 = por %p64, %p65
      %s68 = sadd.s32 %s67, 1
      %p71 = scmp.eq.s32.totalorder %s12, 3
      %p72 = scmp.ne.s32.totalorder %s67, %s69
      %p73 = scmp.eq.s32.totalorder %s12, 0
      %p74 = por %p72, %p73
      %p75 = scmp.ne.s32.totalorder %s67, %s69
      %p76 = scmp.eq.s32.totalorder %s17, 3
      %p77 = por %p75, %p76
      %p78 = scmp.ne.s32.totalorder %s69, %s70
      %p79 = scmp.eq.s32.totalorder %s17, 0
      %p80 = por %p78, %p79
      %p81 = scmp.ne.s32.totalorder %s69, %s70
      %p82 = scmp.eq.s32.totalorder %s18, 3
      %p83 = por %p81, %p82
      %p85 = scmp.ne.s32.totalorder %s70, %s84
      %p86 = scmp.eq.s32.totalorder %s18, 0
      %p87 = por %p85, %p86
      %s88 = ssub.s32 %s12, %s19
      %p89 = scmp.eq.s32.totalorder %s88, 0
      %s91 = sadd.s32 %s90, 1
      %s92 = scalar_select %p89, %s90, %s91
      %p95 = pneg %p89
      %p96 = scmp.eq.s32.totalorder %s12, 3
      %p97 = por %p95, %p96
      %p98 = scmp.ne.s32.totalorder %s90, %s93
      %p99 = scmp.eq.s32.totalorder %s12, 0
      %p100 = por %p98, %p99
      %p101 = scmp.ne.s32.totalorder %s90, %s93
      %p102 = scmp.eq.s32.totalorder %s17, 3
      %p103 = por %p101, %p102
      %p104 = scmp.ne.s32.totalorder %s93, %s94
      %p105 = scmp.eq.s32.totalorder %s17, 0
      %p106 = por %p104, %p105
      %p107 = scmp.ne.s32.totalorder %s93, %s94
      %p108 = scmp.eq.s32.totalorder %s18, 3
      %p109 = por %p107, %p108
      %p111 = scmp.ne.s32.totalorder %s94, %s110
      %p112 = scmp.eq.s32.totalorder %s18, 0
      %p113 = por %p111, %p112
      %p114 = scmp.le.s32.totalorder 1, %s12
      %p115 = scmp.lt.s32.totalorder %s12, 5
      %p116 = pnand %p114, %p115
      %p117 = pneg %p116
      // Predicated region
      $region9: #{tpu_custom_call.1} parent=5 // pred_check
        _
      $region10: #{tpu_custom_call.1} parent=5 // pred_check_branch
        %119 = sbr.rel (%p116) target = $region12
      $region11: #{tpu_custom_call.1} parent=5 // pred_region
        %s120 = ssub.s32 %s12, 1
        // Predicated region
        $region13: #{tpu_custom_call.1} parent=11 // pred_check
          %p121 = pneg %p59
        $region14: #{tpu_custom_call.1} parent=11 // pred_check_branch
          %123 = sbr.rel (%p121) target = $region16
        $region15: #{tpu_custom_call.1} parent=11 // pred_region
          _
        $region16: #{tpu_custom_call.1} parent=11 // pred_fallthru
          _
        // Predicated region
        $region17: #{tpu_custom_call.1} parent=11 // pred_check
          %p124 = pneg %p80
        $region18: #{tpu_custom_call.1} parent=11 // pred_check_branch
          %126 = sbr.rel (%p124) target = $region20
        $region19: #{tpu_custom_call.1} parent=11 // pred_region
          _
        $region20: #{tpu_custom_call.1} parent=11 // pred_fallthru
          _
      $region12: #{tpu_custom_call.1} parent=5 // pred_fallthru
        _
      %p127 = scmp.lt.s32.totalorder %s12, 4
      // Predicated region
      $region21: #{tpu_custom_call.1} parent=5 // pred_check
        %p128 = pneg %p127
      $region22: #{tpu_custom_call.1} parent=5 // pred_check_branch
        %130 = sbr.rel (%p128) target = $region24
      $region23: #{tpu_custom_call.1} parent=5 // pred_region
        // Predicated region
        $region25: #{tpu_custom_call.1} parent=23 // pred_check
          %p131 = pneg %p32
        $region26: #{tpu_custom_call.1} parent=23 // pred_check_branch
          %133 = sbr.rel (%p131) target = $region28
        $region27: #{tpu_custom_call.1} parent=23 // pred_region
          %s134 = sand.u32 %s22, 1
          %s135 = scalar_lea.sflag [#allocation3], %s134
          %s136 = sand.u32 %s22, 1
          %s137 = smul.addr %s136, 32
          %s138 = scalar_lea.vmem [#allocation2], %s137
          %s139 = smul.u32 2, %s12
          %141 = vsyncadd %s135, 0
          %s142 = smul.addr %s139, 2
          %s143 = smul.addr %s142, 8
          %s144 = scalar_lea.hbm %s0, %s143
          %s145 = sshll.u32 %s144, 4
          %s146 = int_to_ptr.hbm [resolvable:$true] %s145
          %s147 = sshll.u32 %s138, 4
          %s148 = int_to_ptr.vmem [resolvable:$true] %s147
          %153 = dma.hbm_to_vmem [thread:$0]  %s146, 512, %s148, %s135, 128, 128, 8
        $region28: #{tpu_custom_call.1} parent=23 // pred_fallthru
          _
      $region24: #{tpu_custom_call.1} parent=5 // pred_fallthru
        _
      %p154 = scmp.le.s32.totalorder 1, %s12
      %p155 = scmp.lt.s32.totalorder %s12, 5
      %p156 = pnand %p154, %p155
      %p157 = pneg %p156
      // Predicated region
      $region29: #{tpu_custom_call.1} parent=5 // pred_check
        _
      $region30: #{tpu_custom_call.1} parent=5 // pred_check_branch
        %159 = sbr.rel (%p156) target = $region32
      $region31: #{tpu_custom_call.1} parent=5 // pred_region
        %s160 = ssub.s32 %s12, 1
        %s161 = sand.u32 %s25, 1
        %s162 = scalar_lea.sflag [#allocation3], %s161
        %s163 = sand.u32 %s25, 1
        %s164 = smul.addr %s163, 32
        %s165 = scalar_lea.vmem [#allocation2], %s164
        // Predicated region
        $region33: #{tpu_custom_call.1} parent=31 // pred_check
          %p166 = pneg %p38
        $region34: #{tpu_custom_call.1} parent=31 // pred_check_branch
          %168 = sbr.rel (%p166) target = $region36
        $region35: #{tpu_custom_call.1} parent=31 // pred_region
          %170 = dma.done %s162, 512
        $region36: #{tpu_custom_call.1} parent=31 // pred_fallthru
          _
        %s171 = sand.u32 %s25, 1
        %s172 = scalar_lea.sflag [#allocation3], %s171
        %s173 = sand.u32 %s25, 1
        %s174 = smul.addr %s173, 32
        %s175 = scalar_lea.vmem [#allocation2], %s174
        %p176 = pneg %p38
        %p177 = pneg %p35
        %p178 = pneg %p59
        %p179 = pneg %p56
        %p180 = pneg %p80
        %p181 = pneg %p77
        %p182 = pneg %p106
        %p183 = pneg %p103
        %s184 = smul.u32 2, %s17
        %p185 = scmp.lt.s32.totalorder %s184, 7
        %s186 = scalar_select %p185, %s184, 7
        %s187 = smul.addr %s186, 4
        %s188 = scalar_lea.vmem %s3, %s187
        %s189 = smul.u32 2, %s17
        %s190 = smul.u32 2, %s17
        %p191 = scmp.lt.s32.totalorder %s190, 7
        %s192 = scalar_select %p191, %s190, 7
        %s193 = smul.addr %s192, 4
        %s194 = scalar_lea.vmem %s3, %s193
        %s195 = smul.u32 2, %s17
        %v196 = vld [vmem:[%s165] sm:$0xff]
        %v197 = vld [vmem:[%s165 + $0x8] sm:$0xff]
        %v198 = vld [vmem:[%s165 + $0x10] sm:$0xff]
        %v199 = vld [vmem:[%s165 + $0x18] sm:$0xff]
        %v200 = vld [vmem:[%s2] sm:$0xff]
        %v201 = vld [vmem:[%s2 + $0x8] sm:$0xff]
        %v202 = vld [vmem:[%s1] sm:$0xf]
        %vm203 = vcmask 130048
        %v205 = vsel %vm203, %v196, 0
        %v208 = vsel %vm203, %v197, 0
        %v211 = vsel %vm203, %v198, 0
        %v214 = vsel %vm203, %v199, 0
        %216 = vmatpush.msra.mxu0 0.0
        %217 = vmatpush.msra.mxu0 0.0
        %218 = vmatpush.msra.mxu0 0.0
        %219 = vmatpush.msra.mxu0 0.0
        %220 = vmatpush.msra.mxu0 0.0
        %221 = vmatpush.msra.mxu0 0.0
        %222 = vmatpush.msra.mxu0 0.0
        %223 = vmatpush.msra.mxu0 0.0
        %224 = vmatpush.msra.mxu0 0.0
        %225 = vmatpush.msra.mxu0 0.0
        %226 = vmatpush.msra.mxu0 0.0
        %227 = vmatpush.msra.mxu0 0.0
        %228 = vmatpush.msra.mxu0 0.0
        %229 = vmatpush.msra.mxu0 0.0
        %230 = vmatpush.msra.mxu0 %v201
        %231 = vmatpush.msra.mxu0 %v200
        %232 = vmatmul.f32.gmra.mxu0 %v205
        %v233 = vpop.f32.mrf.mxu0
        %v234 = vadd.f32 0.0, %v233
        %235 = vmatmul.f32.gmra.mxu0 %v208
        %v236 = vpop.f32.mrf.mxu0
        %v237 = vadd.f32 0.0, %v236
        %238 = vmatmul.f32.gmra.mxu0 %v211
        %v239 = vpop.f32.mrf.mxu0
        %v240 = vadd.f32 0.0, %v239
        %241 = vmatmul.f32.gmra.mxu0 %v214
        %v242 = vpop.f32.mrf.mxu0
        %v243 = vadd.f32 0.0, %v242
        %244 = vdwg.mxu0
        %v246 = vsel %vm203, %v202, 0
        %248 = vmatpush.msra.mxu0 0.0
        %249 = vmatpush.msra.mxu0 0.0
        %250 = vmatpush.msra.mxu0 0.0
        %251 = vmatpush.msra.mxu0 0.0
        %252 = vmatpush.msra.mxu0 0.0
        %253 = vmatpush.msra.mxu0 0.0
        %254 = vmatpush.msra.mxu0 0.0
        %255 = vmatpush.msra.mxu0 0.0
        %256 = vmatpush.msra.mxu0 0.0
        %257 = vmatpush.msra.mxu0 0.0
        %258 = vmatpush.msra.mxu0 0.0
        %259 = vmatpush.msra.mxu0 0.0
        %260 = vmatpush.msra.mxu0 0.0
        %261 = vmatpush.msra.mxu0 0.0
        %262 = vmatpush.msra.mxu0 %v237
        %263 = vmatpush.msra.mxu0 %v234
        %264 = vmatmul.f32.gmra.mxu0 %v246
        %v265 = vpop.f32.mrf.mxu0
        %v266 = vadd.f32 0.0, %v265
        %267 = vdwg.mxu0
        %268 = vmatpush.msra.mxu0 0.0
        %269 = vmatpush.msra.mxu0 0.0
        %270 = vmatpush.msra.mxu0 0.0
        %271 = vmatpush.msra.mxu0 0.0
        %272 = vmatpush.msra.mxu0 0.0
        %273 = vmatpush.msra.mxu0 0.0
        %274 = vmatpush.msra.mxu0 0.0
        %275 = vmatpush.msra.mxu0 0.0
        %276 = vmatpush.msra.mxu0 0.0
        %277 = vmatpush.msra.mxu0 0.0
        %278 = vmatpush.msra.mxu0 0.0
        %279 = vmatpush.msra.mxu0 0.0
        %280 = vmatpush.msra.mxu0 0.0
        %281 = vmatpush.msra.mxu0 0.0
        %282 = vmatpush.msra.mxu0 %v243
        %283 = vmatpush.msra.mxu0 %v240
        %284 = vmatmul.f32.gmra.mxu0 %v246
        %v285 = vpop.f32.mrf.mxu0
        %v286 = vadd.f32 0.0, %v285
        %287 = vdwg.mxu0
        %vm288 = vcmask 27648
        %289 = vst.msk [vmem:[%s194] sm:$0xf] %vm288, %v266
        %290 = vst.msk [vmem:[%s194 + $0x4] sm:$0xf] %vm288, %v286
        %s291 = smul.u32 2, %s17
        %p292 = scmp.lt.s32.totalorder %s291, 7
        %s293 = scalar_select %p292, %s291, 7
        %s294 = smul.addr %s293, 4
        %s295 = scalar_lea.vmem %s3, %s294
        // Predicated region
        $region37: #{tpu_custom_call.1} parent=31 // pred_check
          %p296 = pneg %p103
        $region38: #{tpu_custom_call.1} parent=31 // pred_check_branch
          %298 = sbr.rel (%p296) target = $region40
        $region39: #{tpu_custom_call.1} parent=31 // pred_region
          %s299 = smul.u32 2, %s17
        $region40: #{tpu_custom_call.1} parent=31 // pred_fallthru
          _
      $region32: #{tpu_custom_call.1} parent=5 // pred_fallthru
        _
      %p300 = scmp.le.s32.totalorder 2, %s12
      // Predicated region
      $region41: #{tpu_custom_call.1} parent=5 // pred_check
        %p301 = pneg %p300
      $region42: #{tpu_custom_call.1} parent=5 // pred_check_branch
        %303 = sbr.rel (%p301) target = $region44
      $region43: #{tpu_custom_call.1} parent=5 // pred_region
        %s304 = ssub.s32 %s12, 2
        // Predicated region
        $region45: #{tpu_custom_call.1} parent=43 // pred_check
          %p305 = pneg %p109
        $region46: #{tpu_custom_call.1} parent=43 // pred_check_branch
          %307 = sbr.rel (%p305) target = $region48
        $region47: #{tpu_custom_call.1} parent=43 // pred_region
          %s308 = smul.u32 2, %s18
          %p309 = scmp.lt.s32.totalorder %s308, 7
          %s310 = scalar_select %p309, %s308, 7
          %s311 = smul.addr %s310, 4
          %s312 = scalar_lea.vmem %s3, %s311
        $region48: #{tpu_custom_call.1} parent=43 // pred_fallthru
          _
      $region44: #{tpu_custom_call.1} parent=5 // pred_fallthru
        _
    $region6: #{tpu_custom_call.1} parent=1 // loop_footer
      %s16 = sadd.s32 1, %s12
    $region7: #{tpu_custom_call.1} parent=1 // loop_footer_branch
      %11 = sbr.rel target = $region3
    $region8: #{tpu_custom_call.1} parent=1 // loop_exit
      _
    %313 = vsyncpa [#allocation3], 1
    %s314 = scalar_lea.sflag [#allocation3], 1
    %315 = vsyncpa %s314, 1

</llo_original>
